<compile_context>
chip_gen: v7x
topology: tpu7x:2x2x1
jax: 0.10.0
libtpu: 0.0.40
codegen_flags: <defaults>
</compile_context>

<pallas_src>
from functools import partial

import jax
import jax.numpy as jnp
from jax.experimental import pallas as pl
from jax.experimental.pallas import tpu as pltpu


def _round_up(x, m):
    return (x + m - 1) // m * m


# -----------------------------------------------------------------------------
# Kernel: one batch tile of the whole actor MLP.
# -----------------------------------------------------------------------------
def actor_fused_kernel(x_ref, w_ref, b_ref, out_ref, *, k_in, n_actions):
    """x_ref  : (TB, k_in)   activations for this batch tile (blob dtype)
       w_ref  : (4, D, D)    slab 0..2 = W1,W2,W3 (zero-padded); slab 3 = [Wmu|Wvar|0]
       b_ref  : (8, D) f32   rows 0..3 = b1,b2,b3,[bmu|bvar|0]; rows 4..7 zero
       out_ref: (TB, D) f32  cols [0,n) = mu ; cols [n,2n) = clamp(log_var,-20,2)
    """
    cdt = w_ref.dtype                       # MXU operand dtype (bf16 or f32)
    bias = b_ref[...]                       # (8, D) f32 — exactly one vreg

    # fc1: contract only the k_in real input rows of W1 (rest of the slab unused)
    z = jnp.dot(x_ref[...].astype(cdt), w_ref[0, :k_in, :],
                preferred_element_type=jnp.float32)
    h = jnp.maximum(z + bias[0], 0.0)       # elementwise stays f32 (v5e VPU)

    for layer in (1, 2):                    # fc2 / fc3 + ReLU
        z = jnp.dot(h.astype(cdt), w_ref[layer],
                    preferred_element_type=jnp.float32)
        h = jnp.maximum(z + bias[layer], 0.0)

    out = jnp.dot(h.astype(cdt), w_ref[3],
                  preferred_element_type=jnp.float32) + bias[3]

    # Clamp only the log_var lanes [n_actions, 2*n_actions); per-lane (1, D) mask.
    col = jax.lax.broadcasted_iota(jnp.int32, (1, out.shape[-1]), 1)
    is_var = (col >= n_actions) & (col < 2 * n_actions)
    out = jnp.where(is_var, jnp.clip(out, -20.0, 2.0), out)

    out_ref[...] = out.astype(out_ref.dtype)


# -----------------------------------------------------------------------------
# Host-side packing: square (D, D) weight slabs + separate tiny f32 bias block.
# -----------------------------------------------------------------------------
def pack_actor_params(params, input_dims, n_actions, param_dtype=jnp.bfloat16):
    fc1 = params["w1"].shape[1]
    fc2 = params["w2"].shape[1]
    fc3 = params["w3"].shape[1]
    D = _round_up(max(input_dims, fc1, fc2, fc3, 2 * n_actions, 8), 128)
    k_in = _round_up(input_dims, 16)        # first-layer rows, bf16-tile aligned

    def padw(w):            # (in, out) -> (D, D), zero-padded
        return jnp.pad(w, ((0, D - w.shape[0]), (0, D - w.shape[1])))

    def padb(b):            # (1, out) -> (1, D)
        return jnp.pad(b, ((0, 0), (0, D - b.shape[1])))

    w_head = jnp.concatenate([params["wmu"], params["wvar"]], axis=1)   # fused head
    b_head = jnp.concatenate([params["bmu"], params["bvar"]], axis=1)

    blob = jnp.stack([padw(params["w1"]), padw(params["w2"]),
                      padw(params["w3"]), padw(w_head)], axis=0)        # (4, D, D)

    bias = jnp.concatenate([padb(params["b1"]), padb(params["b2"]),
                            padb(params["b3"]), padb(b_head)], axis=0)  # (4, D)
    bias = jnp.pad(bias, ((0, 8 - bias.shape[0]), (0, 0)))              # (8, D)

    return dict(blob=blob.astype(param_dtype),
                bias=bias.astype(jnp.float32),
                D=D, k_in=k_in, input_dims=input_dims, n_actions=n_actions)


def _pick_tile(B, tile_b):
    if B <= 8:
        return 8
    # Keep >= 2 grid steps so v7x's two TensorCores both take work.
    half = _round_up((B + 1) // 2, 8)
    return max(8, min(tile_b, half))


# -----------------------------------------------------------------------------
# Wrapper: pad batch (and features to k_in only), tile over batch, keep the
# parameter blob VMEM-resident, slice mu/log_var from the lane-dense output.
# -----------------------------------------------------------------------------
def actor_forward(state, packed, *, tile_b=1024):
    B = state.shape[0]
    D = packed["D"]
    k_in = packed["k_in"]
    n_actions = packed["n_actions"]
    input_dims = packed["input_dims"]
    blob = packed["blob"]
    bias = packed["bias"]

    TB = _pick_tile(B, tile_b)
    Bp = _round_up(B, TB)

    # Tiny pad only (batch -> Bp, features -> k_in, NOT 128); cast to the MXU
    # operand dtype so the input DMA is half-width when weights are bf16.
    x = jnp.pad(state, ((0, Bp - B), (0, k_in - input_dims))).astype(blob.dtype)

    out = pl.pallas_call(
        partial(actor_fused_kernel, k_in=k_in, n_actions=n_actions),
        out_shape=jax.ShapeDtypeStruct((Bp, D), jnp.float32),
        grid=(Bp // TB,),
        in_specs=[
            pl.BlockSpec((TB, k_in), lambda i: (i, 0)),     # activations: batch-tiled
            pl.BlockSpec((4, D, D), lambda i: (0, 0, 0)),   # weights: resident, 1 DMA
            pl.BlockSpec((8, D), lambda i: (0, 0)),         # f32 biases: 1 vreg
        ],
        out_specs=pl.BlockSpec((TB, D), lambda i: (i, 0)),  # lane-dense output slab
        compiler_params=pltpu.CompilerParams(
            dimension_semantics=("parallel",),              # v7x: both TCs split batch
            vmem_limit_bytes=32 * 1024 * 1024,              # safe on v7x's 64 MiB VMEM
        ),
    )(x, blob, bias)

    mu = out[:B, :n_actions]
    log_var = out[:B, n_actions:2 * n_actions]
    return mu, log_var


# -----------------------------------------------------------------------------
# Param init (PyTorch-style) and pure-JAX reference.
# -----------------------------------------------------------------------------
def init_actor_params(key, input_dims, n_actions, fc1_dims, fc2_dims):
    """U(-1/sqrt(fan_in), 1/sqrt(fan_in)); weights stored transposed as (in, out)."""
    fc3_dims = fc2_dims  # module sets fc3_dims = fc2_dims

    def linear(key, fan_in, fan_out):
        kw, kb = jax.random.split(key)
        bound = 1.0 / jnp.sqrt(fan_in)
        w = jax.random.uniform(kw, (fan_in, fan_out), jnp.float32, -bound, bound)
        b = jax.random.uniform(kb, (1, fan_out), jnp.float32, -bound, bound)
        return w, b

    keys = jax.random.split(key, 5)
    w1, b1 = linear(keys[0], input_dims, fc1_dims)
    w2, b2 = linear(keys[1], fc1_dims, fc2_dims)
    w3, b3 = linear(keys[2], fc2_dims, fc3_dims)
    wmu, bmu = linear(keys[3], fc3_dims, n_actions)
    wvar, bvar = linear(keys[4], fc3_dims, n_actions)
    return dict(w1=w1, b1=b1, w2=w2, b2=b2, w3=w3, b3=b3,
                wmu=wmu, bmu=bmu, wvar=wvar, bvar=bvar)


def actor_forward_ref(state, p):
    h1 = jnp.maximum(state @ p["w1"] + p["b1"], 0.0)
    h2 = jnp.maximum(h1 @ p["w2"] + p["b2"], 0.0)
    h3 = jnp.maximum(h2 @ p["w3"] + p["b3"], 0.0)
    mu = h3 @ p["wmu"] + p["bmu"]
    log_var = jnp.clip(h3 @ p["wvar"] + p["bvar"], -20.0, 2.0)
    return mu, log_var


if __name__ == "__main__":
    batch = 2
    input_dims = 16
    n_actions = 4
    fc1_dims = 32
    fc2_dims = 32

    key = jax.random.PRNGKey(0)
    k_state, k_params = jax.random.split(key)

    state = jax.random.normal(k_state, (batch, input_dims), dtype=jnp.float32)
    params = init_actor_params(k_params, input_dims, n_actions, fc1_dims, fc2_dims)
    mu_ref, lv_ref = actor_forward_ref(state, params)

    # f32 weight-blob path (exact semantics, strict tolerance).
    packed_f32 = pack_actor_params(params, input_dims, n_actions, jnp.float32)
    mu, log_var = actor_forward(state, packed_f32)
    jax.block_until_ready((mu, log_var))
    assert mu.shape == (batch, n_actions) and log_var.shape == (batch, n_actions)
    assert jnp.allclose(mu, mu_ref, rtol=1e-5, atol=1e-5), "mu mismatch (f32)"
    assert jnp.allclose(log_var, lv_ref, rtol=1e-5, atol=1e-5), "log_var mismatch (f32)"

    # Default path: bf16 MXU operands (all TPU gens), f32 biases/accumulate/elementwise.
    packed_bf16 = pack_actor_params(params, input_dims, n_actions)   # default bf16
    mu_b, lv_b = actor_forward(state, packed_bf16)
    jax.block_until_ready((mu_b, lv_b))
    assert jnp.allclose(mu_b, mu_ref, rtol=5e-2, atol=5e-2), "mu mismatch (bf16)"
    assert jnp.allclose(lv_b, lv_ref, rtol=5e-2, atol=5e-2), "log_var mismatch (bf16)"

    print("KERNEL_OK")
</pallas_src>

<mosaic_0001>
module attributes {stable_mosaic.version = 11 : i64} {
  func.func @actor_fused_kernel(%arg0: i32, %arg1: memref<8x16xf32, #tpu.memory_space<vmem>>, %arg2: memref<4x128x128xf32, #tpu.memory_space<vmem>>, %arg3: memref<8x128xf32, #tpu.memory_space<vmem>>, %arg4: memref<8x128xf32, #tpu.memory_space<vmem>>) attributes {dimension_semantics = [#tpu.dimension_semantics<parallel>], iteration_bounds = array<i64: 1>, scalar_prefetch = 0 : i64, scratch_operands = 0 : i64, tpu.core_type = #tpu.core_type<tc>, window_params = [{transform_indices = @transform_0, window_bounds = array<i64: 8, 16>}, {pipeline_mode = #tpu.pipeline_mode<synchronous>, transform_indices = @transform_1, window_bounds = array<i64: 4, 128, 128>}, {pipeline_mode = #tpu.pipeline_mode<synchronous>, transform_indices = @transform_2, window_bounds = array<i64: 8, 128>}, {transform_indices = @transform_3, window_bounds = array<i64: 8, 128>}]} {
    %c0 = arith.constant 0 : index
    %c0_0 = arith.constant 0 : index
    %0 = vector.load %arg3[%c0, %c0_0] : memref<8x128xf32, #tpu.memory_space<vmem>>, vector<8x128xf32>
    %c0_1 = arith.constant 0 : index
    %c0_2 = arith.constant 0 : index
    %1 = vector.load %arg1[%c0_1, %c0_2] : memref<8x16xf32, #tpu.memory_space<vmem>>, vector<8x16xf32>
    %c0_3 = arith.constant 0 : index
    %c0_4 = arith.constant 0 : index
    %c0_5 = arith.constant 0 : index
    %2 = vector.load %arg2[%c0_3, %c0_4, %c0_5] : memref<4x128x128xf32, #tpu.memory_space<vmem>>, vector<1x16x128xf32>
    %3 = vector.shape_cast %2 : vector<1x16x128xf32> to vector<16x128xf32>
    %cst = arith.constant dense<0.000000e+00> : vector<8x128xf32>
    %4 = tpu.matmul %1, %3, %cst {dimension_numbers = #tpu.dot_dimension_numbers<[1], [0], [0], [1], [0, 0, 1, 1], [], []>} : vector<8x16xf32>, vector<16x128xf32>, vector<8x128xf32> -> vector<8x128xf32>
    %5 = vector.extract_strided_slice %0 {offsets = [0, 0], sizes = [1, 128], strides = [1, 1]} : vector<8x128xf32> to vector<1x128xf32>
    %6 = vector.shape_cast %5 : vector<1x128xf32> to vector<128xf32>
    %7 = vector.shape_cast %6 : vector<128xf32> to vector<1x128xf32>
    %8 = vector.broadcast %7 : vector<1x128xf32> to vector<8x128xf32>
    %9 = arith.addf %4, %8 : vector<8x128xf32>
    %cst_6 = arith.constant 0.000000e+00 : f32
    %10 = vector.broadcast %cst_6 : f32 to vector<8x128xf32>
    %11 = arith.maximumf %9, %10 : vector<8x128xf32>
    %c1 = arith.constant 1 : index
    %c0_7 = arith.constant 0 : index
    %c0_8 = arith.constant 0 : index
    %12 = vector.load %arg2[%c1, %c0_7, %c0_8] : memref<4x128x128xf32, #tpu.memory_space<vmem>>, vector<1x128x128xf32>
    %13 = vector.shape_cast %12 : vector<1x128x128xf32> to vector<128x128xf32>
    %cst_9 = arith.constant dense<0.000000e+00> : vector<8x128xf32>
    %14 = tpu.matmul %11, %13, %cst_9 {dimension_numbers = #tpu.dot_dimension_numbers<[1], [0], [0], [1], [0, 0, 1, 1], [], []>} : vector<8x128xf32>, vector<128x128xf32>, vector<8x128xf32> -> vector<8x128xf32>
    %15 = vector.extract_strided_slice %0 {offsets = [1, 0], sizes = [1, 128], strides = [1, 1]} : vector<8x128xf32> to vector<1x128xf32>
    %16 = vector.shape_cast %15 : vector<1x128xf32> to vector<128xf32>
    %17 = vector.shape_cast %16 : vector<128xf32> to vector<1x128xf32>
    %18 = vector.broadcast %17 : vector<1x128xf32> to vector<8x128xf32>
    %19 = arith.addf %14, %18 : vector<8x128xf32>
    %cst_10 = arith.constant 0.000000e+00 : f32
    %20 = vector.broadcast %cst_10 : f32 to vector<8x128xf32>
    %21 = arith.maximumf %19, %20 : vector<8x128xf32>
    %c2 = arith.constant 2 : index
    %c0_11 = arith.constant 0 : index
    %c0_12 = arith.constant 0 : index
    %22 = vector.load %arg2[%c2, %c0_11, %c0_12] : memref<4x128x128xf32, #tpu.memory_space<vmem>>, vector<1x128x128xf32>
    %23 = vector.shape_cast %22 : vector<1x128x128xf32> to vector<128x128xf32>
    %cst_13 = arith.constant dense<0.000000e+00> : vector<8x128xf32>
    %24 = tpu.matmul %21, %23, %cst_13 {dimension_numbers = #tpu.dot_dimension_numbers<[1], [0], [0], [1], [0, 0, 1, 1], [], []>} : vector<8x128xf32>, vector<128x128xf32>, vector<8x128xf32> -> vector<8x128xf32>
    %25 = vector.extract_strided_slice %0 {offsets = [2, 0], sizes = [1, 128], strides = [1, 1]} : vector<8x128xf32> to vector<1x128xf32>
    %26 = vector.shape_cast %25 : vector<1x128xf32> to vector<128xf32>
    %27 = vector.shape_cast %26 : vector<128xf32> to vector<1x128xf32>
    %28 = vector.broadcast %27 : vector<1x128xf32> to vector<8x128xf32>
    %29 = arith.addf %24, %28 : vector<8x128xf32>
    %cst_14 = arith.constant 0.000000e+00 : f32
    %30 = vector.broadcast %cst_14 : f32 to vector<8x128xf32>
    %31 = arith.maximumf %29, %30 : vector<8x128xf32>
    %c3 = arith.constant 3 : index
    %c0_15 = arith.constant 0 : index
    %c0_16 = arith.constant 0 : index
    %32 = vector.load %arg2[%c3, %c0_15, %c0_16] : memref<4x128x128xf32, #tpu.memory_space<vmem>>, vector<1x128x128xf32>
    %33 = vector.shape_cast %32 : vector<1x128x128xf32> to vector<128x128xf32>
    %cst_17 = arith.constant dense<0.000000e+00> : vector<8x128xf32>
    %34 = tpu.matmul %31, %33, %cst_17 {dimension_numbers = #tpu.dot_dimension_numbers<[1], [0], [0], [1], [0, 0, 1, 1], [], []>} : vector<8x128xf32>, vector<128x128xf32>, vector<8x128xf32> -> vector<8x128xf32>
    %35 = vector.extract_strided_slice %0 {offsets = [3, 0], sizes = [1, 128], strides = [1, 1]} : vector<8x128xf32> to vector<1x128xf32>
    %36 = vector.shape_cast %35 : vector<1x128xf32> to vector<128xf32>
    %37 = vector.shape_cast %36 : vector<128xf32> to vector<1x128xf32>
    %38 = vector.broadcast %37 : vector<1x128xf32> to vector<8x128xf32>
    %39 = arith.addf %34, %38 : vector<8x128xf32>
    %40 = tpu.iota {dimensions = array<i32: 1>} : vector<1x128xi32>
    %c4_i32 = arith.constant 4 : i32
    %41 = vector.broadcast %c4_i32 : i32 to vector<1x128xi32>
    %42 = arith.cmpi sge, %40, %41 : vector<1x128xi32>
    %c8_i32 = arith.constant 8 : i32
    %43 = vector.broadcast %c8_i32 : i32 to vector<1x128xi32>
    %44 = arith.cmpi slt, %40, %43 : vector<1x128xi32>
    %45 = arith.andi %42, %44 : vector<1x128xi1>
    %cst_18 = arith.constant -2.000000e+01 : f32
    %cst_19 = arith.constant 2.000000e+00 : f32
    %46 = vector.broadcast %cst_18 : f32 to vector<8x128xf32>
    %47 = arith.maximumf %46, %39 : vector<8x128xf32>
    %48 = vector.broadcast %cst_19 : f32 to vector<8x128xf32>
    %49 = arith.minimumf %48, %47 : vector<8x128xf32>
    %50 = vector.shape_cast %45 : vector<1x128xi1> to vector<1x128xi1>
    %51 = vector.broadcast %50 : vector<1x128xi1> to vector<8x128xi1>
    %52 = arith.select %51, %49, %39 : vector<8x128xi1>, vector<8x128xf32>
    %c0_20 = arith.constant 0 : index
    %c0_21 = arith.constant 0 : index
    %53 = vector.load %arg4[%c0_20, %c0_21] : memref<8x128xf32, #tpu.memory_space<vmem>>, vector<8x128xf32>
    tpu.vector_store %arg4[%c0_20, %c0_21], %52 {strides = array<i32>} : memref<8x128xf32, #tpu.memory_space<vmem>>, vector<8x128xf32>,
    return
  }
  func.func @transform_0(%arg0: i32) -> (i32, i32) {
    %c0_i32 = arith.constant 0 : i32
    %c0_i32_0 = arith.constant 0 : i32
    return %arg0, %c0_i32 : i32, i32
  }
  func.func @transform_1(%arg0: i32) -> (i32, i32, i32) {
    %c0_i32 = arith.constant 0 : i32
    %c0_i32_0 = arith.constant 0 : i32
    %c0_i32_1 = arith.constant 0 : i32
    %c0_i32_2 = arith.constant 0 : i32
    return %c0_i32, %c0_i32_0, %c0_i32_1 : i32, i32, i32
  }
  func.func @transform_2(%arg0: i32) -> (i32, i32) {
    %c0_i32 = arith.constant 0 : i32
    %c0_i32_0 = arith.constant 0 : i32
    %c0_i32_1 = arith.constant 0 : i32
    return %c0_i32, %c0_i32_0 : i32, i32
  }
  func.func @transform_3(%arg0: i32) -> (i32, i32) {
    %c0_i32 = arith.constant 0 : i32
    %c0_i32_0 = arith.constant 0 : i32
    return %arg0, %c0_i32 : i32, i32
  }
}

</mosaic_0001>

<llo_original>
// kernel: tpu_custom_call.1
$region0: #{tpu_custom_call.1}
  #allocation0 [shape = 'u32[]', space=smem, size = 0x4, offset = 0x4, fixed_abs, tag = 'smem constant byte address 0x4 - core index']
  #allocation1 [shape = 'u32[144,128]{1,0:T(1,128)}', space=vmem, size = 0x12000, scoped, tag = 'internal scratch']
  %s0 = inlined_call_operand.hbm [shape: f32[8,16], index: 0, kind: input, shape index: {}]
  %s1 = inlined_call_operand.hbm [shape: f32[4,128,128], index: 1, kind: input, shape index: {}]
  %s2 = inlined_call_operand.hbm [shape: f32[8,128], index: 2, kind: input, shape index: {}]
  %s3 = inlined_call_operand.hbm [shape: f32[8,128], index: 3, kind: output, shape index: {}]
  %s4 = sld [smem:[#allocation0]]
  $region34: #{tpu_custom_call.1} parent=0
    _
  %s6 = ssub.s32 1, %s4
  %s7 = scalar_select 0, %s6, %s4
  $region1: #{tpu_custom_call.1} parent=0
    #allocation2 [shape = 'u8[4096]{0}', space=vmem, size = 0x1000, scoped, tag = 'input window, operand 0, single buffered']
    #allocation3 [shape = 's32[1]{0}', space=sflag, size = 0x4, scoped, tag = 'scoped memory for tpu_custom_call.1']
    #allocation4 [shape = 's32[1]{0}', space=sflag, size = 0x4, scoped, tag = 'scoped memory for tpu_custom_call.1']
    #allocation5 [shape = 'u8[262144]{0}', space=vmem, size = 0x40000, scoped, tag = 'input window, operand 1, single buffered']
    #allocation6 [shape = 's32[1]{0}', space=sflag, size = 0x4, scoped, tag = 'scoped memory for tpu_custom_call.1']
    #allocation7 [shape = 'u8[4096]{0}', space=vmem, size = 0x1000, scoped, tag = 'input window, operand 2, single buffered']
    #allocation8 [shape = 'u8[4096]{0}', space=vmem, size = 0x1000, scoped, tag = 'output window, operand 0, single buffered']
    %8 = vsyncpa [#allocation3], 0
    %9 = vsyncpa [#allocation6], 0
    %10 = vsyncpa [#allocation4], 0
    // Predicated region
    $region2: #{tpu_custom_call.1} parent=1 // pred_check
      _
    $region3: #{tpu_custom_call.1} parent=1 // pred_check_branch
      %12 = sbr.rel (0) target = $region5
    $region4: #{tpu_custom_call.1} parent=1 // pred_region
      %s14 = ssub.s32 128, 128
      %15 = vsyncadd [#allocation3], %s14
      %s17 = sshll.u32 [#allocation2], 4
      %s18 = int_to_ptr.vmem [resolvable:$true] %s17
      %20 = dma.hbm_to_vmem [thread:$0]  %s0, 128, %s18, [#allocation3]
    $region5: #{tpu_custom_call.1} parent=1 // pred_fallthru
      _
    // Predicated region
    $region6: #{tpu_custom_call.1} parent=1 // pred_check
      _
    $region7: #{tpu_custom_call.1} parent=1 // pred_check_branch
      %22 = sbr.rel (0) target = $region9
    $region8: #{tpu_custom_call.1} parent=1 // pred_region
      %s24 = ssub.s32 8192, 8192
      %25 = vsyncadd [#allocation6], %s24
      %s26 = sshll.u32 [#allocation5], 4
      %s27 = int_to_ptr.vmem [resolvable:$true] %s26
      %32 = dma.hbm_to_vmem [thread:$0]  %s1, 8192, %s27, [#allocation6], 128, 128, 8
    $region9: #{tpu_custom_call.1} parent=1 // pred_fallthru
      _
    // Predicated region
    $region10: #{tpu_custom_call.1} parent=1 // pred_check
      _
    $region11: #{tpu_custom_call.1} parent=1 // pred_check_branch
      %34 = sbr.rel (0) target = $region13
    $region12: #{tpu_custom_call.1} parent=1 // pred_region
      %s36 = ssub.s32 128, 128
      %37 = vsyncadd [#allocation6], %s36
      %s39 = sshll.u32 [#allocation7], 4
      %s40 = int_to_ptr.vmem [resolvable:$true] %s39
      %42 = dma.hbm_to_vmem [thread:$0]  %s2, 128, %s40, [#allocation6]
    $region13: #{tpu_custom_call.1} parent=1 // pred_fallthru
      _
    // Predicated region
    $region14: #{tpu_custom_call.1} parent=1 // pred_check
      _
    $region15: #{tpu_custom_call.1} parent=1 // pred_check_branch
      %44 = sbr.rel (0) target = $region17
    $region16: #{tpu_custom_call.1} parent=1 // pred_region
      %45 = dma.done [#allocation3], 128
    $region17: #{tpu_custom_call.1} parent=1 // pred_fallthru
      _
    // Predicated region
    $region18: #{tpu_custom_call.1} parent=1 // pred_check
      _
    $region19: #{tpu_custom_call.1} parent=1 // pred_check_branch
      %47 = sbr.rel (0) target = $region21
    $region20: #{tpu_custom_call.1} parent=1 // pred_region
      %48 = dma.done [#allocation6], 8192
    $region21: #{tpu_custom_call.1} parent=1 // pred_fallthru
      _
    // Predicated region
    $region22: #{tpu_custom_call.1} parent=1 // pred_check
      _
    $region23: #{tpu_custom_call.1} parent=1 // pred_check_branch
      %50 = sbr.rel (0) target = $region25
    $region24: #{tpu_custom_call.1} parent=1 // pred_region
      %51 = dma.done [#allocation6], 128
    $region25: #{tpu_custom_call.1} parent=1 // pred_fallthru
      _
    %v52 = vld [vmem:[#allocation7] sm:$0xff]
    %v53 = vld [vmem:[#allocation2] sm:$0xff]
    %v54 = vld [vmem:[#allocation5] sm:$0xff]
    %v55 = vld [vmem:[#allocation5 + $0x8] sm:$0xff]
    %v56 = vlaneseq
    %v57 = vshrl.u32 %v56, 7
    %v58 = vsub.s32 0, %v57
    %v59 = vrot.slane %v52, %v58
    %vm60 = vcmask 130048
    %v62 = vsel %vm60, %v53, 0
    %64 = vmatprep.subr.mxu0 0.0
    %65 = vmatpush1.msra.mxu0 %v54
    %66 = vmatprep.subr.mxu0 0.0
    %67 = vmatpush1.msra.mxu0 %v55
    %68 = vmatprep.subr.mxu0 0.0
    %69 = vmatpush1.msra.mxu0 0.0
    %70 = vmatprep.subr.mxu0 0.0
    %71 = vmatpush1.msra.mxu0 0.0
    %72 = vmatprep.subr.mxu0 0.0
    %73 = vmatpush1.msra.mxu0 0.0
    %74 = vmatprep.subr.mxu0 0.0
    %75 = vmatpush1.msra.mxu0 0.0
    %76 = vmatprep.subr.mxu0 0.0
    %77 = vmatpush1.msra.mxu0 0.0
    %78 = vmatprep.subr.mxu0 0.0
    %79 = vmatpush1.msra.mxu0 0.0
    %80 = vmatprep.subr.mxu0 0.0
    %81 = vmatpush1.msra.mxu0 0.0
    %82 = vmatprep.subr.mxu0 0.0
    %83 = vmatpush1.msra.mxu0 0.0
    %84 = vmatprep.subr.mxu0 0.0
    %85 = vmatpush1.msra.mxu0 0.0
    %86 = vmatprep.subr.mxu0 0.0
    %87 = vmatpush1.msra.mxu0 0.0
    %88 = vmatprep.subr.mxu0 0.0
    %89 = vmatpush1.msra.mxu0 0.0
    %90 = vmatprep.subr.mxu0 0.0
    %91 = vmatpush1.msra.mxu0 0.0
    %92 = vmatprep.subr.mxu0 0.0
    %93 = vmatpush1.msra.mxu0 0.0
    %94 = vmatprep.subr.mxu0 0.0
    %95 = vmatpush1.msra.mxu0 0.0
    %96 = vmatprep.subr.mxu0 0.0
    %97 = vmatpush1.msra.mxu0 0.0
    %98 = vmatprep.subr.mxu0 0.0
    %99 = vmatpush1.msra.mxu0 0.0
    %100 = vmatprep.subr.mxu0 0.0
    %101 = vmatpush1.msra.mxu0 0.0
    %102 = vmatprep.subr.mxu0 0.0
    %103 = vmatpush1.msra.mxu0 0.0
    %104 = vmatprep.subr.mxu0 0.0
    %105 = vmatpush1.msra.mxu0 0.0
    %106 = vmatprep.subr.mxu0 0.0
    %107 = vmatpush1.msra.mxu0 0.0
    %108 = vmatprep.subr.mxu0 0.0
    %109 = vmatpush1.msra.mxu0 0.0
    %110 = vmatprep.subr.mxu0 0.0
    %111 = vmatpush1.msra.mxu0 0.0
    %112 = vmatprep.subr.mxu0 0.0
    %113 = vmatpush1.msra.mxu0 0.0
    %114 = vmatprep.subr.mxu0 0.0
    %115 = vmatpush1.msra.mxu0 0.0
    %116 = vmatprep.subr.mxu0 0.0
    %117 = vmatpush1.msra.mxu0 0.0
    %118 = vmatprep.subr.mxu0 0.0
    %119 = vmatpush1.msra.mxu0 0.0
    %120 = vmatprep.subr.mxu0 0.0
    %121 = vmatpush1.msra.mxu0 0.0
    %122 = vmatprep.subr.mxu0 0.0
    %123 = vmatpush1.msra.mxu0 0.0
    %124 = vmatprep.subr.mxu0 0.0
    %125 = vmatpush1.msra.mxu0 0.0
    %126 = vmatprep.subr.mxu0 0.0
    %127 = vmatpush1.msra.mxu0 0.0
    %128 = vmatprep.mubr.f32.mxu0 0.0
    %129 = vmatmul.mubr.f32.gmra.mrb[0].mxu0 %v62
    %v130 = vpop.f32.mrb[0].mxu0
    %v131 = vadd.f32 %v59, %v130
    %v132 = vpop.f32.mrb[0].mxu0
    %133 = vdwg.mxu0
    %v134 = vmax.f32 %v131, 0.0
    %s135 = scalar_lea.vmem [#allocation5], 128
    %v136 = vld [vmem:[%s135] sm:$0xff]
    %v137 = vld [vmem:[%s135 + $0x8] sm:$0xff]
    %v138 = vld [vmem:[%s135 + $0x10] sm:$0xff]
    %v139 = vld [vmem:[%s135 + $0x18] sm:$0xff]
    %v140 = vld [vmem:[%s135 + $0x20] sm:$0xff]
    %v141 = vld [vmem:[%s135 + $0x28] sm:$0xff]
    %v142 = vld [vmem:[%s135 + $0x30] sm:$0xff]
    %v143 = vld [vmem:[%s135 + $0x38] sm:$0xff]
    %v144 = vld [vmem:[%s135 + $0x40] sm:$0xff]
    %v145 = vld [vmem:[%s135 + $0x48] sm:$0xff]
    %v146 = vld [vmem:[%s135 + $0x50] sm:$0xff]
    %v147 = vld [vmem:[%s135 + $0x58] sm:$0xff]
    %v148 = vld [vmem:[%s135 + $0x60] sm:$0xff]
    %v149 = vld [vmem:[%s135 + $0x68] sm:$0xff]
    %v150 = vld [vmem:[%s135 + $0x70] sm:$0xff]
    %v151 = vld [vmem:[%s135 + $0x78] sm:$0xff]
    %v152 = vlaneseq
    %v153 = vshrl.u32 %v152, 7
    %v154 = vsub.s32 1, %v153
    %v155 = vrot.slane %v52, %v154
    %156 = vmatprep.subr.mxu0 0.0
    %157 = vmatpush1.msra.mxu0 %v136
    %158 = vmatprep.subr.mxu0 0.0
    %159 = vmatpush1.msra.mxu0 %v137
    %160 = vmatprep.subr.mxu0 0.0
    %161 = vmatpush1.msra.mxu0 %v138
    %162 = vmatprep.subr.mxu0 0.0
    %163 = vmatpush1.msra.mxu0 %v139
    %164 = vmatprep.subr.mxu0 0.0
    %165 = vmatpush1.msra.mxu0 %v140
    %166 = vmatprep.subr.mxu0 0.0
    %167 = vmatpush1.msra.mxu0 %v141
    %168 = vmatprep.subr.mxu0 0.0
    %169 = vmatpush1.msra.mxu0 %v142
    %170 = vmatprep.subr.mxu0 0.0
    %171 = vmatpush1.msra.mxu0 %v143
    %172 = vmatprep.subr.mxu0 0.0
    %173 = vmatpush1.msra.mxu0 %v144
    %174 = vmatprep.subr.mxu0 0.0
    %175 = vmatpush1.msra.mxu0 %v145
    %176 = vmatprep.subr.mxu0 0.0
    %177 = vmatpush1.msra.mxu0 %v146
    %178 = vmatprep.subr.mxu0 0.0
    %179 = vmatpush1.msra.mxu0 %v147
    %180 = vmatprep.subr.mxu0 0.0
    %181 = vmatpush1.msra.mxu0 %v148
    %182 = vmatprep.subr.mxu0 0.0
    %183 = vmatpush1.msra.mxu0 %v149
    %184 = vmatprep.subr.mxu0 0.0
    %185 = vmatpush1.msra.mxu0 %v150
    %186 = vmatprep.subr.mxu0 0.0
    %187 = vmatpush1.msra.mxu0 %v151
    %188 = vmatprep.subr.mxu0 0.0
    %189 = vmatpush1.msra.mxu0 0.0
    %190 = vmatprep.subr.mxu0 0.0
    %191 = vmatpush1.msra.mxu0 0.0
    %192 = vmatprep.subr.mxu0 0.0
    %193 = vmatpush1.msra.mxu0 0.0
    %194 = vmatprep.subr.mxu0 0.0
    %195 = vmatpush1.msra.mxu0 0.0
    %196 = vmatprep.subr.mxu0 0.0
    %197 = vmatpush1.msra.mxu0 0.0
    %198 = vmatprep.subr.mxu0 0.0
    %199 = vmatpush1.msra.mxu0 0.0
    %200 = vmatprep.subr.mxu0 0.0
    %201 = vmatpush1.msra.mxu0 0.0
    %202 = vmatprep.subr.mxu0 0.0
    %203 = vmatpush1.msra.mxu0 0.0
    %204 = vmatprep.subr.mxu0 0.0
    %205 = vmatpush1.msra.mxu0 0.0
    %206 = vmatprep.subr.mxu0 0.0
    %207 = vmatpush1.msra.mxu0 0.0
    %208 = vmatprep.subr.mxu0 0.0
    %209 = vmatpush1.msra.mxu0 0.0
    %210 = vmatprep.subr.mxu0 0.0
    %211 = vmatpush1.msra.mxu0 0.0
    %212 = vmatprep.subr.mxu0 0.0
    %213 = vmatpush1.msra.mxu0 0.0
    %214 = vmatprep.subr.mxu0 0.0
    %215 = vmatpush1.msra.mxu0 0.0
    %216 = vmatprep.subr.mxu0 0.0
    %217 = vmatpush1.msra.mxu0 0.0
    %218 = vmatprep.subr.mxu0 0.0
    %219 = vmatpush1.msra.mxu0 0.0
    %220 = vmatprep.mubr.f32.mxu0 0.0
    %221 = vmatmul.mubr.f32.gmra.mrb[0].mxu0 %v134
    %v222 = vpop.f32.mrb[0].mxu0
    %v223 = vadd.f32 %v155, %v222
    %v224 = vpop.f32.mrb[0].mxu0
    %225 = vdwg.mxu0
    %v226 = vmax.f32 %v223, 0.0
    %s227 = scalar_lea.vmem [#allocation5], 256
    %v228 = vld [vmem:[%s227] sm:$0xff]
    %v229 = vld [vmem:[%s227 + $0x8] sm:$0xff]
    %v230 = vld [vmem:[%s227 + $0x10] sm:$0xff]
    %v231 = vld [vmem:[%s227 + $0x18] sm:$0xff]
    %v232 = vld [vmem:[%s227 + $0x20] sm:$0xff]
    %v233 = vld [vmem:[%s227 + $0x28] sm:$0xff]
    %v234 = vld [vmem:[%s227 + $0x30] sm:$0xff]
    %v235 = vld [vmem:[%s227 + $0x38] sm:$0xff]
    %v236 = vld [vmem:[%s227 + $0x40] sm:$0xff]
    %v237 = vld [vmem:[%s227 + $0x48] sm:$0xff]
    %v238 = vld [vmem:[%s227 + $0x50] sm:$0xff]
    %v239 = vld [vmem:[%s227 + $0x58] sm:$0xff]
    %v240 = vld [vmem:[%s227 + $0x60] sm:$0xff]
    %v241 = vld [vmem:[%s227 + $0x68] sm:$0xff]
    %v242 = vld [vmem:[%s227 + $0x70] sm:$0xff]
    %v243 = vld [vmem:[%s227 + $0x78] sm:$0xff]
    %v244 = vlaneseq
    %v245 = vshrl.u32 %v244, 7
    %v246 = vsub.s32 2, %v245
    %v247 = vrot.slane %v52, %v246
    %248 = vmatprep.subr.mxu0 0.0
    %249 = vmatpush1.msra.mxu0 %v228
    %250 = vmatprep.subr.mxu0 0.0
    %251 = vmatpush1.msra.mxu0 %v229
    %252 = vmatprep.subr.mxu0 0.0
    %253 = vmatpush1.msra.mxu0 %v230
    %254 = vmatprep.subr.mxu0 0.0
    %255 = vmatpush1.msra.mxu0 %v231
    %256 = vmatprep.subr.mxu0 0.0
    %257 = vmatpush1.msra.mxu0 %v232
    %258 = vmatprep.subr.mxu0 0.0
    %259 = vmatpush1.msra.mxu0 %v233
    %260 = vmatprep.subr.mxu0 0.0
    %261 = vmatpush1.msra.mxu0 %v234
    %262 = vmatprep.subr.mxu0 0.0
    %263 = vmatpush1.msra.mxu0 %v235
    %264 = vmatprep.subr.mxu0 0.0
    %265 = vmatpush1.msra.mxu0 %v236
    %266 = vmatprep.subr.mxu0 0.0
    %267 = vmatpush1.msra.mxu0 %v237
    %268 = vmatprep.subr.mxu0 0.0
    %269 = vmatpush1.msra.mxu0 %v238
    %270 = vmatprep.subr.mxu0 0.0
    %271 = vmatpush1.msra.mxu0 %v239
    %272 = vmatprep.subr.mxu0 0.0
    %273 = vmatpush1.msra.mxu0 %v240
    %274 = vmatprep.subr.mxu0 0.0
    %275 = vmatpush1.msra.mxu0 %v241
    %276 = vmatprep.subr.mxu0 0.0
    %277 = vmatpush1.msra.mxu0 %v242
    %278 = vmatprep.subr.mxu0 0.0
    %279 = vmatpush1.msra.mxu0 %v243
    %280 = vmatprep.subr.mxu0 0.0
    %281 = vmatpush1.msra.mxu0 0.0
    %282 = vmatprep.subr.mxu0 0.0
    %283 = vmatpush1.msra.mxu0 0.0
    %284 = vmatprep.subr.mxu0 0.0
    %285 = vmatpush1.msra.mxu0 0.0
    %286 = vmatprep.subr.mxu0 0.0
    %287 = vmatpush1.msra.mxu0 0.0
    %288 = vmatprep.subr.mxu0 0.0
    %289 = vmatpush1.msra.mxu0 0.0
    %290 = vmatprep.subr.mxu0 0.0
    %291 = vmatpush1.msra.mxu0 0.0
    %292 = vmatprep.subr.mxu0 0.0
    %293 = vmatpush1.msra.mxu0 0.0
    %294 = vmatprep.subr.mxu0 0.0
    %295 = vmatpush1.msra.mxu0 0.0
    %296 = vmatprep.subr.mxu0 0.0
    %297 = vmatpush1.msra.mxu0 0.0
    %298 = vmatprep.subr.mxu0 0.0
    %299 = vmatpush1.msra.mxu0 0.0
    %300 = vmatprep.subr.mxu0 0.0
    %301 = vmatpush1.msra.mxu0 0.0
    %302 = vmatprep.subr.mxu0 0.0
    %303 = vmatpush1.msra.mxu0 0.0
    %304 = vmatprep.subr.mxu0 0.0
    %305 = vmatpush1.msra.mxu0 0.0
    %306 = vmatprep.subr.mxu0 0.0
    %307 = vmatpush1.msra.mxu0 0.0
    %308 = vmatprep.subr.mxu0 0.0
    %309 = vmatpush1.msra.mxu0 0.0
    %310 = vmatprep.subr.mxu0 0.0
    %311 = vmatpush1.msra.mxu0 0.0
    %312 = vmatprep.mubr.f32.mxu0 0.0
    %313 = vmatmul.mubr.f32.gmra.mrb[0].mxu0 %v226
    %v314 = vpop.f32.mrb[0].mxu0
    %v315 = vadd.f32 %v247, %v314
    %v316 = vpop.f32.mrb[0].mxu0
    %317 = vdwg.mxu0
    %v318 = vmax.f32 %v315, 0.0
    %s319 = scalar_lea.vmem [#allocation5], 384
    %v320 = vld [vmem:[%s319] sm:$0xff]
    %v321 = vld [vmem:[%s319 + $0x8] sm:$0xff]
    %v322 = vld [vmem:[%s319 + $0x10] sm:$0xff]
    %v323 = vld [vmem:[%s319 + $0x18] sm:$0xff]
    %v324 = vld [vmem:[%s319 + $0x20] sm:$0xff]
    %v325 = vld [vmem:[%s319 + $0x28] sm:$0xff]
    %v326 = vld [vmem:[%s319 + $0x30] sm:$0xff]
    %v327 = vld [vmem:[%s319 + $0x38] sm:$0xff]
    %v328 = vld [vmem:[%s319 + $0x40] sm:$0xff]
    %v329 = vld [vmem:[%s319 + $0x48] sm:$0xff]
    %v330 = vld [vmem:[%s319 + $0x50] sm:$0xff]
    %v331 = vld [vmem:[%s319 + $0x58] sm:$0xff]
    %v332 = vld [vmem:[%s319 + $0x60] sm:$0xff]
    %v333 = vld [vmem:[%s319 + $0x68] sm:$0xff]
    %v334 = vld [vmem:[%s319 + $0x70] sm:$0xff]
    %v335 = vld [vmem:[%s319 + $0x78] sm:$0xff]
    %v336 = vlaneseq
    %v337 = vshrl.u32 %v336, 7
    %v338 = vsub.s32 3, %v337
    %v339 = vrot.slane %v52, %v338
    %340 = vmatprep.subr.mxu0 0.0
    %341 = vmatpush1.msra.mxu0 %v320
    %342 = vmatprep.subr.mxu0 0.0
    %343 = vmatpush1.msra.mxu0 %v321
    %344 = vmatprep.subr.mxu0 0.0
    %345 = vmatpush1.msra.mxu0 %v322
    %346 = vmatprep.subr.mxu0 0.0
    %347 = vmatpush1.msra.mxu0 %v323
    %348 = vmatprep.subr.mxu0 0.0
    %349 = vmatpush1.msra.mxu0 %v324
    %350 = vmatprep.subr.mxu0 0.0
    %351 = vmatpush1.msra.mxu0 %v325
    %352 = vmatprep.subr.mxu0 0.0
    %353 = vmatpush1.msra.mxu0 %v326
    %354 = vmatprep.subr.mxu0 0.0
    %355 = vmatpush1.msra.mxu0 %v327
    %356 = vmatprep.subr.mxu0 0.0
    %357 = vmatpush1.msra.mxu0 %v328
    %358 = vmatprep.subr.mxu0 0.0
    %359 = vmatpush1.msra.mxu0 %v329
    %360 = vmatprep.subr.mxu0 0.0
    %361 = vmatpush1.msra.mxu0 %v330
    %362 = vmatprep.subr.mxu0 0.0
    %363 = vmatpush1.msra.mxu0 %v331
    %364 = vmatprep.subr.mxu0 0.0
    %365 = vmatpush1.msra.mxu0 %v332
    %366 = vmatprep.subr.mxu0 0.0
    %367 = vmatpush1.msra.mxu0 %v333
    %368 = vmatprep.subr.mxu0 0.0
    %369 = vmatpush1.msra.mxu0 %v334
    %370 = vmatprep.subr.mxu0 0.0
    %371 = vmatpush1.msra.mxu0 %v335
    %372 = vmatprep.subr.mxu0 0.0
    %373 = vmatpush1.msra.mxu0 0.0
    %374 = vmatprep.subr.mxu0 0.0
    %375 = vmatpush1.msra.mxu0 0.0
    %376 = vmatprep.subr.mxu0 0.0
    %377 = vmatpush1.msra.mxu0 0.0
    %378 = vmatprep.subr.mxu0 0.0
    %379 = vmatpush1.msra.mxu0 0.0
    %380 = vmatprep.subr.mxu0 0.0
    %381 = vmatpush1.msra.mxu0 0.0
    %382 = vmatprep.subr.mxu0 0.0
    %383 = vmatpush1.msra.mxu0 0.0
    %384 = vmatprep.subr.mxu0 0.0
    %385 = vmatpush1.msra.mxu0 0.0
    %386 = vmatprep.subr.mxu0 0.0
    %387 = vmatpush1.msra.mxu0 0.0
    %388 = vmatprep.subr.mxu0 0.0
    %389 = vmatpush1.msra.mxu0 0.0
    %390 = vmatprep.subr.mxu0 0.0
    %391 = vmatpush1.msra.mxu0 0.0
    %392 = vmatprep.subr.mxu0 0.0
    %393 = vmatpush1.msra.mxu0 0.0
    %394 = vmatprep.subr.mxu0 0.0
    %395 = vmatpush1.msra.mxu0 0.0
    %396 = vmatprep.subr.mxu0 0.0
    %397 = vmatpush1.msra.mxu0 0.0
    %398 = vmatprep.subr.mxu0 0.0
    %399 = vmatpush1.msra.mxu0 0.0
    %400 = vmatprep.subr.mxu0 0.0
    %401 = vmatpush1.msra.mxu0 0.0
    %402 = vmatprep.subr.mxu0 0.0
    %403 = vmatpush1.msra.mxu0 0.0
    %404 = vmatprep.mubr.f32.mxu0 0.0
    %405 = vmatmul.mubr.f32.gmra.mrb[0].mxu0 %v318
    %v406 = vpop.f32.mrb[0].mxu0
    %v407 = vadd.f32 %v339, %v406
    %v408 = vpop.f32.mrb[0].mxu0
    %409 = vdwg.mxu0
    %v410 = vlaneseq
    %v411 = vand.u32 %v410, 127
    %vm412 = vcmp.ge.s32.totalorder %v411, 4
    %vm413 = vcmp.lt.s32.totalorder %v411, 8
    %vm414 = vmand %vm412, %vm413
    %v415 = vmax.f32 %v407, -20.0
    %v416 = vmin.f32 %v415, 2.0
    %v417 = vsel %vm414, 1, 0
    %vm418 = vcmp.eq.s32.totalorder %v417, 1
    %v419 = vsel %vm418, %v416, %v407
    %420 = vst [vmem:[#allocation8] sm:$0xff] %v419
    // Predicated region
    $region26: #{tpu_custom_call.1} parent=1 // pred_check
      _
    $region27: #{tpu_custom_call.1} parent=1 // pred_check_branch
      %422 = sbr.rel (0) target = $region29
    $region28: #{tpu_custom_call.1} parent=1 // pred_region
      %s424 = ssub.s32 128, 128
      %425 = vsyncadd [#allocation4], %s424
      %s427 = sshll.u32 [#allocation8], 4
      %s428 = int_to_ptr.vmem [resolvable:$true] %s427
      %430 = dma.vmem_to_hbm [thread:$0]  %s428, 128, %s3, [#allocation4]
    $region29: #{tpu_custom_call.1} parent=1 // pred_fallthru
      _
    // Predicated region
    $region30: #{tpu_custom_call.1} parent=1 // pred_check
      _
    $region31: #{tpu_custom_call.1} parent=1 // pred_check_branch
      %432 = sbr.rel (0) target = $region33
    $region32: #{tpu_custom_call.1} parent=1 // pred_region
      %433 = dma.done [#allocation4], 128
    $region33: #{tpu_custom_call.1} parent=1 // pred_fallthru
      _
    %434 = vsyncpa [#allocation3], 1
    %435 = vsyncpa [#allocation6], 1
    %436 = vsyncpa [#allocation4], 1

</llo_original>
